<compile_context>
chip_gen: v5e
topology: v5e:2x2
jax: 0.10.0
libtpu: 0.0.40
codegen_flags: <defaults>
</compile_context>

<pallas_src>
import math
import functools

import jax
import jax.numpy as jnp
from jax import lax
from jax.experimental import pallas as pl
from jax.experimental.pallas import tpu as pltpu


def _round_up(x, m):
    return (x + m - 1) // m * m


# ----------------------------------------------------------------------------
# Kernels
# ----------------------------------------------------------------------------
def _row_inv_norm_kernel(v_ref, out_ref):
    """out[r, 0] = 1 / max(||v[r, :]||_2, 1e-12)   (matches F.normalize eps)."""
    v = v_ref[...].astype(jnp.float32)
    ssq = jnp.sum(v * v, axis=-1, keepdims=True)          # (T, 1)
    out_ref[...] = lax.rsqrt(jnp.maximum(ssq, 1e-24))      # rsqrt -> EUP slot


def _linear_kernel(x_ref, w_ref, out_ref):
    # eval path: out = x @ W.T, contracted with dot_general (no explicit .T).
    out_ref[...] = lax.dot_general(
        x_ref[...], w_ref[...],
        dimension_numbers=(((1,), (1,)), ((), ())),
        preferred_element_type=jnp.float32,
    ).astype(out_ref.dtype)


def _arcface_kernel(x_ref, w_ref, inv_x_ref, inv_w_ref, lbl_ref, out_ref, *,
                    cos_m, sin_m, scale, c_tile):
    # Raw contraction in the operands' native dtype; f32 accumulation on MXU.
    dots = lax.dot_general(
        x_ref[...], w_ref[...],
        dimension_numbers=(((1,), (1,)), ((), ())),
        preferred_element_type=jnp.float32,
    )                                                      # (TB, TC) f32
    # Fold the precomputed inverse norms into the small (TB, TC) result
    # instead of normalizing the big (TB, D) / (TC, D) operands.
    cosine = dots * inv_x_ref[...] * inv_w_ref[...]
    # Clamp so MXU/normalization rounding can never make 1 - cos^2 negative.
    sine = jnp.sqrt(jnp.maximum(1.0 - cosine * cosine, 0.0))
    phi = cosine * cos_m - sine * sin_m
    phi = jnp.where(cosine > 0.0, phi, cosine)             # as in the PyTorch module
    # One-hot select; class ids must be offset by this tile's base class.
    base = pl.program_id(1) * c_tile
    cls_ids = lax.broadcasted_iota(jnp.int32, cosine.shape, 1) + base
    one_hot = cls_ids == lbl_ref[...]                      # (TB, TC) vs (TB, 1)
    out_ref[...] = (jnp.where(one_hot, phi, cosine) * scale).astype(out_ref.dtype)


# ----------------------------------------------------------------------------
# Wrapper (the "module")
# ----------------------------------------------------------------------------
class ArcMarginModelPallas:
    def __init__(self, in_features, num_classes, margin, scale, key,
                 block_b=None, block_c=None):
        self.in_features = in_features
        self.out_features = num_classes
        self.margin = float(margin)
        self.scale = float(scale)
        self.cos_m = math.cos(self.margin)
        self.sin_m = math.sin(self.margin)
        self.th = math.cos(math.pi - self.margin)            # unused in forward
        self.mm = math.sin(math.pi - self.margin) * margin   # unused in forward
        self.block_b = block_b                                # optional tile overrides
        self.block_c = block_c

        # xavier_uniform_ init: U(-a, a), a = sqrt(6 / (fan_in + fan_out))
        bound = math.sqrt(6.0 / (in_features + num_classes))
        self.weight = jax.random.uniform(
            key, (num_classes, in_features), jnp.float32,
            minval=-bound, maxval=bound)
        # bias exists in the PyTorch module but is never used in forward()
        self.bias = jnp.zeros((num_classes,), jnp.float32)

    # ---------------- tiling helpers ----------------
    def _tiles(self, B):
        D_pad = _round_up(self.in_features, 128)
        if self.block_c is not None:
            TC = _round_up(self.block_c, 128)
        else:
            c128 = _round_up(self.out_features, 128)
            # <=1024-row W tile keeps double-buffered streaming inside v7x's
            # 64 MiB VMEM; sweep up to 2048-4096 on v5e/v6e if desired.
            TC = c128 if c128 <= 2048 else 1024
        C_pad = _round_up(self.out_features, TC)
        if self.block_b is not None:
            TB = _round_up(self.block_b, 8)
        else:
            TB = min(_round_up(max(B, 1), 8), 128)
        B_pad = _round_up(B, TB)
        return TB, TC, B_pad, C_pad, D_pad

    @staticmethod
    def _compiler_params(buffer_bytes):
        # Double-buffered pipeline buffers + headroom for internal scratch.
        vmem_limit = int(min(64 << 20, max(buffer_bytes + (4 << 20), 16 << 20)))
        return pltpu.CompilerParams(
            dimension_semantics=("parallel", "parallel"),
            vmem_limit_bytes=vmem_limit,
        )

    @staticmethod
    def _row_inv_norms(v, tile_rows):
        """1 / max(||row||, 1e-12) for every row of v, as an (R, 1) f32 array."""
        R, D = v.shape
        return pl.pallas_call(
            _row_inv_norm_kernel,
            out_shape=jax.ShapeDtypeStruct((R, 1), jnp.float32),
            grid_spec=pl.GridSpec(
                grid=(R // tile_rows,),
                in_specs=[pl.BlockSpec((tile_rows, D), lambda i: (i, 0))],
                out_specs=pl.BlockSpec((tile_rows, 1), lambda i: (i, 0)),
            ),
            compiler_params=pltpu.CompilerParams(
                dimension_semantics=("parallel",)),
        )(v)

    # ---------------- forward ----------------
    def __call__(self, x, label=None, training=True):
        B, D = x.shape
        assert D == self.in_features
        C = self.out_features
        TB, TC, B_pad, C_pad, D_pad = self._tiles(B)

        # Wrapper-side padding to (8, 128)-aligned tiles (sliced away at the end).
        x_p = jnp.pad(x, ((0, B_pad - B), (0, D_pad - D)))
        w_p = jnp.pad(self.weight, ((0, C_pad - C), (0, D_pad - D)))
        out_dtype = jnp.result_type(x.dtype, self.weight.dtype)

        grid = (B_pad // TB, C_pad // TC)
        buf_bytes = 2 * (TB * D_pad * jnp.dtype(x_p.dtype).itemsize
                         + TC * D_pad * jnp.dtype(w_p.dtype).itemsize
                         + TB * TC * jnp.dtype(out_dtype).itemsize)

        if (not training) or (label is None):
            # eval path: plain linear (no bias), weight streamed over C tiles.
            out = pl.pallas_call(
                _linear_kernel,
                out_shape=jax.ShapeDtypeStruct((B_pad, C_pad), out_dtype),
                grid_spec=pl.GridSpec(
                    grid=grid,
                    in_specs=[pl.BlockSpec((TB, D_pad), lambda i, j: (i, 0)),
                              pl.BlockSpec((TC, D_pad), lambda i, j: (j, 0))],
                    out_specs=pl.BlockSpec((TB, TC), lambda i, j: (i, j)),
                ),
                compiler_params=self._compiler_params(buf_bytes),
            )(x_p, w_p)
            return out[:B, :C]

        # training path: ArcFace margin.
        inv_x = self._row_inv_norms(x_p, TB)                       # (B_pad, 1)
        inv_w = self._row_inv_norms(w_p, TC).reshape(1, C_pad)     # (1, C_pad)
        lbl = jnp.pad(label.astype(jnp.int32).reshape(B, 1),
                      ((0, B_pad - B), (0, 0)), constant_values=-1)

        kernel = functools.partial(
            _arcface_kernel, cos_m=self.cos_m, sin_m=self.sin_m,
            scale=self.scale, c_tile=TC)

        out = pl.pallas_call(
            kernel,
            out_shape=jax.ShapeDtypeStruct((B_pad, C_pad), out_dtype),
            grid_spec=pl.GridSpec(
                grid=grid,
                in_specs=[
                    pl.BlockSpec((TB, D_pad), lambda i, j: (i, 0)),   # x
                    pl.BlockSpec((TC, D_pad), lambda i, j: (j, 0)),   # W (streamed)
                    pl.BlockSpec((TB, 1), lambda i, j: (i, 0)),       # 1/||x||
                    pl.BlockSpec((1, TC), lambda i, j: (0, j)),       # 1/||w||
                    pl.BlockSpec((TB, 1), lambda i, j: (i, 0)),       # labels
                ],
                out_specs=pl.BlockSpec((TB, TC), lambda i, j: (i, j)),
            ),
            compiler_params=self._compiler_params(buf_bytes),
        )(x_p, w_p, inv_x, inv_w, lbl)
        return out[:B, :C]


# ----------------------------------------------------------------------------
# Pure-JAX reference (mirrors the PyTorch forward)
# ----------------------------------------------------------------------------
def _ref_forward(x, weight, label, cos_m, sin_m, scale, training=True):
    hi = lax.Precision.HIGHEST
    if (not training) or (label is None):
        return jnp.matmul(x, weight.T, precision=hi)
    x_n = x / jnp.maximum(jnp.linalg.norm(x, axis=-1, keepdims=True), 1e-12)
    w_n = weight / jnp.maximum(jnp.linalg.norm(weight, axis=-1, keepdims=True), 1e-12)
    cosine = jnp.matmul(x_n, w_n.T, precision=hi)
    sine = jnp.sqrt(jnp.maximum(1.0 - cosine ** 2, 0.0))
    phi = cosine * cos_m - sine * sin_m
    phi = jnp.where(cosine > 0, phi, cosine)
    one_hot = jax.nn.one_hot(label, weight.shape[0], dtype=cosine.dtype)
    return jnp.where(one_hot == 1, phi, cosine) * scale


def _bf16_grid(a):
    # Snap test data to bf16-representable values so the check is insensitive
    # to the MXU's default f32-matmul precision (kernel contracts raw operands).
    return a.astype(jnp.bfloat16).astype(jnp.float32)


# ----------------------------------------------------------------------------
if __name__ == "__main__":
    def run_case(B, D, C, margin, scale, key, block_b=None, block_c=None):
        k_w, k_x, k_l = jax.random.split(key, 3)
        model = ArcMarginModelPallas(D, C, margin, scale, k_w,
                                     block_b=block_b, block_c=block_c)
        model.weight = _bf16_grid(model.weight)
        x = _bf16_grid(jax.random.normal(k_x, (B, D), jnp.float32))
        label = jax.random.randint(k_l, (B,), 0, C, jnp.int32)

        out_train = jax.block_until_ready(model(x, label, training=True))
        out_eval = jax.block_until_ready(model(x, None, training=False))

        ref_train = _ref_forward(x, model.weight, label,
                                 model.cos_m, model.sin_m, model.scale, True)
        ref_eval = _ref_forward(x, model.weight, None,
                                model.cos_m, model.sin_m, model.scale, False)

        assert out_train.shape == (B, C) and out_eval.shape == (B, C)
        err_t = float(jnp.max(jnp.abs(out_train - ref_train)))
        err_e = float(jnp.max(jnp.abs(out_eval - ref_eval)))
        assert jnp.allclose(out_train, ref_train, atol=1e-3, rtol=1e-3), err_t
        assert jnp.allclose(out_eval, ref_eval, atol=1e-3, rtol=1e-3), err_e

    key = jax.random.PRNGKey(0)
    # Small shape consistent with the module (in_features=32, num_classes=16).
    run_case(B=8, D=32, C=16, margin=0.5, scale=30.0,
             key=jax.random.fold_in(key, 0))
    # Unaligned shape with multiple B- and C-tiles (exercises the 2-D grid,
    # weight streaming and the per-tile one-hot class offset).
    run_case(B=20, D=72, C=300, margin=0.5, scale=30.0,
             key=jax.random.fold_in(key, 1), block_b=8, block_c=128)

    print("KERNEL_OK")
</pallas_src>

<mosaic_0001>
module attributes {stable_mosaic.version = 11 : i64} {
  func.func @_row_inv_norm_kernel(%arg0: i32, %arg1: memref<8x128xf32, #tpu.memory_space<vmem>>, %arg2: memref<8x1xf32, #tpu.memory_space<vmem>>) attributes {dimension_semantics = [#tpu.dimension_semantics<parallel>], iteration_bounds = array<i64: 1>, scalar_prefetch = 0 : i64, scratch_operands = 0 : i64, tpu.core_type = #tpu.core_type<tc>, window_params = [{transform_indices = @transform_0, window_bounds = array<i64: 8, 128>}, {transform_indices = @transform_1, window_bounds = array<i64: 8, 1>}]} {
    %c0 = arith.constant 0 : index
    %c0_0 = arith.constant 0 : index
    %0 = vector.load %arg1[%c0, %c0_0] : memref<8x128xf32, #tpu.memory_space<vmem>>, vector<8x128xf32>
    %1 = arith.mulf %0, %0 : vector<8x128xf32>
    %cst = arith.constant dense<0.000000e+00> : vector<8xf32>
    %2 = vector.multi_reduction <add>, %1, %cst [1] : vector<8x128xf32> to vector<8xf32>
    %3 = vector.shape_cast %2 : vector<8xf32> to vector<8x1xf32>
    %cst_1 = arith.constant 1.000000e-24 : f32
    %4 = vector.broadcast %cst_1 : f32 to vector<8x1xf32>
    %5 = arith.maximumf %3, %4 : vector<8x1xf32>
    %6 = math.rsqrt %5 : vector<8x1xf32>
    %c0_2 = arith.constant 0 : index
    %c0_3 = arith.constant 0 : index
    %7 = vector.load %arg2[%c0_2, %c0_3] : memref<8x1xf32, #tpu.memory_space<vmem>>, vector<8x1xf32>
    tpu.vector_store %arg2[%c0_2, %c0_3], %6 {strides = array<i32>} : memref<8x1xf32, #tpu.memory_space<vmem>>, vector<8x1xf32>,
    return
  }
  func.func @transform_0(%arg0: i32) -> (i32, i32) {
    %c0_i32 = arith.constant 0 : i32
    %c0_i32_0 = arith.constant 0 : i32
    return %arg0, %c0_i32 : i32, i32
  }
  func.func @transform_1(%arg0: i32) -> (i32, i32) {
    %c0_i32 = arith.constant 0 : i32
    %c0_i32_0 = arith.constant 0 : i32
    return %arg0, %c0_i32 : i32, i32
  }
}

</mosaic_0001>

<llo_original>
// kernel: tpu_custom_call.1
$region0: #{tpu_custom_call.1}
  #allocation0 [shape = 'u32[]', space=smem, size = 0x4, offset = 0x4, fixed_abs, tag = 'smem constant byte address 0x4 - core index']
  #allocation1 [shape = 'u32[72,128]{1,0:T(1,128)}', space=vmem, size = 0x9000, scoped, tag = 'internal scratch']
  %s0 = inlined_call_operand.hbm [shape: f32[8,128], index: 0, kind: input, shape index: {}]
  %s1 = inlined_call_operand.vmem [shape: f32[8,1], index: 1, kind: output, shape index: {}]
  %s2 = sld [smem:[#allocation0]]
  $region18: #{tpu_custom_call.1} parent=0
    _
  %s4 = ssub.s32 1, %s2
  %s5 = scalar_select 0, %s4, %s2
  $region1: #{tpu_custom_call.1} parent=0
    #allocation2 [shape = 'u8[4096]{0}', space=vmem, size = 0x1000, scoped, tag = 'input window, operand 0, single buffered']
    #allocation3 [shape = 's32[1]{0}', space=sflag, size = 0x4, scoped, tag = 'scoped memory for tpu_custom_call.1']
    %6 = vsyncpa [#allocation3], 0
    // Predicated region
    $region2: #{tpu_custom_call.1} parent=1 // pred_check
      _
    $region3: #{tpu_custom_call.1} parent=1 // pred_check_branch
      %8 = sbr.rel (0) target = $region5
    $region4: #{tpu_custom_call.1} parent=1 // pred_region
      %10 = vsyncadd [#allocation3], 0
      %s12 = sshll.u32 %s0, 4
      %s13 = int_to_ptr.hbm [resolvable:$true] %s12
      %s14 = sshll.u32 [#allocation2], 4
      %s15 = int_to_ptr.vmem [resolvable:$true] %s14
      %17 = dma.hbm_to_vmem [thread:$0]  %s13, 128, %s15, [#allocation3]
    $region5: #{tpu_custom_call.1} parent=1 // pred_fallthru
      _
    // Predicated region
    $region6: #{tpu_custom_call.1} parent=1 // pred_check
      _
    $region7: #{tpu_custom_call.1} parent=1 // pred_check_branch
      %19 = sbr.rel (0) target = $region9
    $region8: #{tpu_custom_call.1} parent=1 // pred_region
      %21 = dma.done [#allocation3], 128
    $region9: #{tpu_custom_call.1} parent=1 // pred_fallthru
      _
    %v22 = vld [vmem:[#allocation2] sm:$0xff]
    %v23 = vmul.f32 %v22, %v22
    %24 = vadd.xlane.f32.xlu0 %v23
    %v25 = vpop.xlane.xlu0 %24
    %v26 = vmax.f32 %v25, 1e-24
    %v27 = vrsqrt.pop %v26
    %v28 = vmul.f32 %v27, %v26
    %v29 = vmul.f32 %v28, %v27
    %v30 = vmul.f32 0.5, %v29
    %v31 = vsub.f32 1.5, %v30
    %v32 = vmul.f32 %v27, %v31
    %vm33 = vweird.f32 %v26
    %vm34 = vweird.f32 %v27
    %vm35 = vmor %vm33, %vm34
    %v36 = vsel %vm35, %v27, %v32
    %vm37 = vcmask 7168
    %38 = vst.msk [vmem:[%s1] sm:$0xff] %vm37, %v36
    // Predicated region
    $region10: #{tpu_custom_call.1} parent=1 // pred_check
      _
    $region11: #{tpu_custom_call.1} parent=1 // pred_check_branch
      %40 = sbr.rel (0) target = $region13
    $region12: #{tpu_custom_call.1} parent=1 // pred_region
      _
    $region13: #{tpu_custom_call.1} parent=1 // pred_fallthru
      _
    // Predicated region
    $region14: #{tpu_custom_call.1} parent=1 // pred_check
      _
    $region15: #{tpu_custom_call.1} parent=1 // pred_check_branch
      %42 = sbr.rel (0) target = $region17
    $region16: #{tpu_custom_call.1} parent=1 // pred_region
      _
    $region17: #{tpu_custom_call.1} parent=1 // pred_fallthru
      _
    %43 = vsyncpa [#allocation3], 1

</llo_original>
